<compile_context>
chip_gen: v7x
topology: tpu7x:2x2x1
jax: 0.10.0
libtpu: 0.0.40
codegen_flags: <defaults>
</compile_context>

<pallas_src>
import jax
import jax.numpy as jnp
import numpy as np
from jax.experimental import pallas as pl
from jax.experimental.pallas import tpu as pltpu


# ---------------------------------------------------------------------------
# Kernels
# ---------------------------------------------------------------------------
def mlp_kernel(xT_ref, w1_ref, b1_ref, w2_ref, b2_ref, oT_ref):
    # Transposed (lane-dense) layout: columns are batch rows.
    xT = xT_ref[...]                                                  # [F, TB]
    h = jnp.tanh(
        jnp.dot(w1_ref[...], xT, preferred_element_type=jnp.float32)
        + b1_ref[...])                                                # [H, TB]
    q = (jnp.dot(w2_ref[...], h, preferred_element_type=jnp.float32)
         + b2_ref[...])                                               # [A, TB]
    oT_ref[...] = q.astype(oT_ref.dtype)


def act_kernel(x_ref, w1_ref, b1_ref, w2_ref, b2_ref, a_ref):
    # Forward pass for a single observation (column vector) + fused argmax.
    x = x_ref[...]                                                    # [F, 1]
    h = jnp.tanh(
        jnp.dot(w1_ref[...], x, preferred_element_type=jnp.float32)
        + b1_ref[...])                                                # [H, 1]
    q = (jnp.dot(w2_ref[...], h, preferred_element_type=jnp.float32)
         + b2_ref[...])                                               # [A, 1]
    n_actions = q.shape[0]
    if n_actions == 2:
        # Two-action fast path: action = (q1 > q0); tie -> 0 (first occurrence),
        # matching torch.argmax.  One iota + mul + sublane-sum + compare.
        sign = 2.0 * jax.lax.broadcasted_iota(jnp.float32, q.shape, 0) - 1.0
        diff = jnp.sum(q * sign, axis=0, keepdims=True)               # q1 - q0
        a_ref[...] = (diff > 0.0).astype(jnp.int32)
    else:
        # General first-occurrence argmax via iota + masked min.
        ids = jax.lax.broadcasted_iota(jnp.float32, q.shape, 0)
        max_q = jnp.max(q, axis=0, keepdims=True)
        idx = jnp.min(jnp.where(q >= max_q, ids, float(n_actions)),
                      axis=0, keepdims=True)
        a_ref[...] = idx.astype(jnp.int32)
    # TODO(synk): the act path is dominated by pallas_call dispatch + weight
    # DMA; batching multiple env observations per call is the real lever.


# ---------------------------------------------------------------------------
# Tiling helper
# ---------------------------------------------------------------------------
def _round_up(x, m):
    return ((x + m - 1) // m) * m


def _choose_tile(B, batch_tile):
    """Pick (tile_cols, num_tiles) for the lane (batch) axis.

    Single grid step when the whole batch fits (fast path).  Otherwise use
    128-aligned tiles and prefer an even tile count so v7x's two TensorCores
    split the "parallel" grid axis evenly (harmless on v5e/v6e).
    """
    if B <= batch_tile:
        return B, 1
    TB = _round_up(batch_tile, 128)
    nt = pl.cdiv(B, TB)
    if nt % 2 and nt > 1:
        for cand in (nt + 1, nt - 1):                 # rebalance to even count
            if cand >= 2 and cand % 2 == 0:
                TB_c = _round_up(pl.cdiv(B, cand), 128)
                if pl.cdiv(B, TB_c) == cand:
                    return TB_c, cand
    return TB, nt


# ---------------------------------------------------------------------------
# Wrappers
# ---------------------------------------------------------------------------
def network_forward(x, w1, b1, w2, b2, *, batch_tile=2048):
    """Pallas equivalent of Network.forward.

    x: [B, in_features] float32; weights in PyTorch layout (w: [out, in],
    b stored as [out, 1]).  Returns [B, n_actions] float32.
    """
    B, F = x.shape
    H = w1.shape[0]
    A = w2.shape[0]

    xT = x.T                                    # [F, B] — layout plumbing only
    TB, num_tiles = _choose_tile(B, batch_tile)

    qT = pl.pallas_call(
        mlp_kernel,
        out_shape=jax.ShapeDtypeStruct((A, B), jnp.float32),
        grid=(num_tiles,),
        in_specs=[
            pl.BlockSpec((F, TB), lambda i: (0, i)),   # batch tile of x (lanes)
            pl.BlockSpec((H, F), lambda i: (0, 0)),    # w1 VMEM-resident
            pl.BlockSpec((H, 1), lambda i: (0, 0)),    # b1 resident
            pl.BlockSpec((A, H), lambda i: (0, 0)),    # w2 resident
            pl.BlockSpec((A, 1), lambda i: (0, 0)),    # b2 resident
        ],
        out_specs=pl.BlockSpec((A, TB), lambda i: (0, i)),  # lane-dense output
        compiler_params=pltpu.CompilerParams(
            dimension_semantics=("parallel",)),
    )(xT, w1, b1, w2, b2)

    return qT.T                                 # [B, A]


def network_act(obs, w1, b1, w2, b2):
    """Pallas equivalent of Network.act: argmax_a Q(obs, a), fused in-kernel."""
    x = obs[:, None].astype(jnp.float32)        # [F, 1]
    full = lambda a: pl.BlockSpec(a.shape, lambda: (0,) * a.ndim)
    action = pl.pallas_call(
        act_kernel,
        out_shape=jax.ShapeDtypeStruct((1, 1), jnp.int32),
        grid=(),
        in_specs=[full(x), full(w1), full(b1), full(w2), full(b2)],
        out_specs=pl.BlockSpec((1, 1), lambda: (0, 0)),
    )(x, w1, b1, w2, b2)
    return action[0, 0]


def init_params(key, in_features, hidden, n_actions):
    # nn.Linear-style U(-1/sqrt(fan_in), 1/sqrt(fan_in)); PyTorch [out, in] layout.
    k1, k2, k3, k4 = jax.random.split(key, 4)
    lim1 = 1.0 / np.sqrt(in_features)
    lim2 = 1.0 / np.sqrt(hidden)
    w1 = jax.random.uniform(k1, (hidden, in_features), jnp.float32, -lim1, lim1)
    b1 = jax.random.uniform(k2, (hidden, 1), jnp.float32, -lim1, lim1)
    w2 = jax.random.uniform(k3, (n_actions, hidden), jnp.float32, -lim2, lim2)
    b2 = jax.random.uniform(k4, (n_actions, 1), jnp.float32, -lim2, lim2)
    return w1, b1, w2, b2


if __name__ == "__main__":
    # CartPole-v1: observation_space.shape == (4,), action_space.n == 2
    IN_FEATURES, HIDDEN, N_ACTIONS = 4, 64, 2

    key = jax.random.PRNGKey(0)
    k_params, k_small, k_big = jax.random.split(key, 3)
    w1, b1, w2, b2 = init_params(k_params, IN_FEATURES, HIDDEN, N_ACTIONS)

    def ref_fwd(x):
        return jnp.tanh(x @ w1.T + b1.T) @ w2.T + b2.T

    # --- small batch: single grid step, full-extent blocks ------------------
    x_small = jax.random.normal(k_small, (8, IN_FEATURES), jnp.float32)
    q_small = network_forward(x_small, w1, b1, w2, b2)
    jax.block_until_ready(q_small)
    assert q_small.shape == (8, N_ACTIONS)
    np.testing.assert_allclose(np.asarray(q_small), np.asarray(ref_fwd(x_small)),
                               rtol=1e-5, atol=1e-5)

    # --- ragged larger batch: exercises lane-tiled grid, resident weights,
    #     even tile-count balancing, and discarded OOB output columns --------
    x_big = jax.random.normal(k_big, (536, IN_FEATURES), jnp.float32)
    q_big = network_forward(x_big, w1, b1, w2, b2, batch_tile=256)
    jax.block_until_ready(q_big)
    assert q_big.shape == (536, N_ACTIONS)
    np.testing.assert_allclose(np.asarray(q_big), np.asarray(ref_fwd(x_big)),
                               rtol=1e-5, atol=1e-5)

    # --- act path: fused in-kernel argmax ------------------------------------
    obs = x_small[0]
    action = network_act(obs, w1, b1, w2, b2)
    jax.block_until_ready(action)
    ref_action = int(jnp.argmax(ref_fwd(obs[None, :])[0]))
    assert int(action) == ref_action
    assert int(action) in (0, 1)

    print("KERNEL_OK")
</pallas_src>

<mosaic_0001>
module attributes {stable_mosaic.version = 11 : i64} {
  func.func @mlp_kernel(%arg0: i32, %arg1: memref<4x8xf32, #tpu.memory_space<vmem>>, %arg2: memref<64x4xf32, #tpu.memory_space<vmem>>, %arg3: memref<64x1xf32, #tpu.memory_space<vmem>>, %arg4: memref<2x64xf32, #tpu.memory_space<vmem>>, %arg5: memref<2x1xf32, #tpu.memory_space<vmem>>, %arg6: memref<2x8xf32, #tpu.memory_space<vmem>>) attributes {dimension_semantics = [#tpu.dimension_semantics<parallel>], iteration_bounds = array<i64: 1>, scalar_prefetch = 0 : i64, scratch_operands = 0 : i64, tpu.core_type = #tpu.core_type<tc>, window_params = [{transform_indices = @transform_0, window_bounds = array<i64: 4, 8>}, {pipeline_mode = #tpu.pipeline_mode<synchronous>, transform_indices = @transform_1, window_bounds = array<i64: 64, 4>}, {pipeline_mode = #tpu.pipeline_mode<synchronous>, transform_indices = @transform_2, window_bounds = array<i64: 64, 1>}, {pipeline_mode = #tpu.pipeline_mode<synchronous>, transform_indices = @transform_3, window_bounds = array<i64: 2, 64>}, {pipeline_mode = #tpu.pipeline_mode<synchronous>, transform_indices = @transform_4, window_bounds = array<i64: 2, 1>}, {transform_indices = @transform_5, window_bounds = array<i64: 2, 8>}]} {
    %c0 = arith.constant 0 : index
    %c0_0 = arith.constant 0 : index
    %0 = vector.load %arg1[%c0, %c0_0] : memref<4x8xf32, #tpu.memory_space<vmem>>, vector<4x8xf32>
    %c0_1 = arith.constant 0 : index
    %c0_2 = arith.constant 0 : index
    %1 = vector.load %arg2[%c0_1, %c0_2] : memref<64x4xf32, #tpu.memory_space<vmem>>, vector<64x4xf32>
    %cst = arith.constant dense<0.000000e+00> : vector<64x8xf32>
    %2 = tpu.matmul %1, %0, %cst {dimension_numbers = #tpu.dot_dimension_numbers<[1], [0], [0], [1], [0, 0, 1, 1], [], []>} : vector<64x4xf32>, vector<4x8xf32>, vector<64x8xf32> -> vector<64x8xf32>
    %c0_3 = arith.constant 0 : index
    %c0_4 = arith.constant 0 : index
    %3 = vector.load %arg3[%c0_3, %c0_4] : memref<64x1xf32, #tpu.memory_space<vmem>>, vector<64x1xf32>
    %4 = vector.broadcast %3 : vector<64x1xf32> to vector<64x8xf32>
    %5 = arith.addf %2, %4 : vector<64x8xf32>
    %6 = math.tanh %5 : vector<64x8xf32>
    %c0_5 = arith.constant 0 : index
    %c0_6 = arith.constant 0 : index
    %7 = vector.load %arg4[%c0_5, %c0_6] : memref<2x64xf32, #tpu.memory_space<vmem>>, vector<2x64xf32>
    %cst_7 = arith.constant dense<0.000000e+00> : vector<2x8xf32>
    %8 = tpu.matmul %7, %6, %cst_7 {dimension_numbers = #tpu.dot_dimension_numbers<[1], [0], [0], [1], [0, 0, 1, 1], [], []>} : vector<2x64xf32>, vector<64x8xf32>, vector<2x8xf32> -> vector<2x8xf32>
    %c0_8 = arith.constant 0 : index
    %c0_9 = arith.constant 0 : index
    %9 = vector.load %arg5[%c0_8, %c0_9] : memref<2x1xf32, #tpu.memory_space<vmem>>, vector<2x1xf32>
    %10 = vector.broadcast %9 : vector<2x1xf32> to vector<2x8xf32>
    %11 = arith.addf %8, %10 : vector<2x8xf32>
    %c0_10 = arith.constant 0 : index
    %c0_11 = arith.constant 0 : index
    %12 = vector.load %arg6[%c0_10, %c0_11] : memref<2x8xf32, #tpu.memory_space<vmem>>, vector<2x8xf32>
    tpu.vector_store %arg6[%c0_10, %c0_11], %11 {strides = array<i32>} : memref<2x8xf32, #tpu.memory_space<vmem>>, vector<2x8xf32>,
    return
  }
  func.func @transform_0(%arg0: i32) -> (i32, i32) {
    %c0_i32 = arith.constant 0 : i32
    %c0_i32_0 = arith.constant 0 : i32
    return %c0_i32, %arg0 : i32, i32
  }
  func.func @transform_1(%arg0: i32) -> (i32, i32) {
    %c0_i32 = arith.constant 0 : i32
    %c0_i32_0 = arith.constant 0 : i32
    %c0_i32_1 = arith.constant 0 : i32
    return %c0_i32, %c0_i32_0 : i32, i32
  }
  func.func @transform_2(%arg0: i32) -> (i32, i32) {
    %c0_i32 = arith.constant 0 : i32
    %c0_i32_0 = arith.constant 0 : i32
    %c0_i32_1 = arith.constant 0 : i32
    return %c0_i32, %c0_i32_0 : i32, i32
  }
  func.func @transform_3(%arg0: i32) -> (i32, i32) {
    %c0_i32 = arith.constant 0 : i32
    %c0_i32_0 = arith.constant 0 : i32
    %c0_i32_1 = arith.constant 0 : i32
    return %c0_i32, %c0_i32_0 : i32, i32
  }
  func.func @transform_4(%arg0: i32) -> (i32, i32) {
    %c0_i32 = arith.constant 0 : i32
    %c0_i32_0 = arith.constant 0 : i32
    %c0_i32_1 = arith.constant 0 : i32
    return %c0_i32, %c0_i32_0 : i32, i32
  }
  func.func @transform_5(%arg0: i32) -> (i32, i32) {
    %c0_i32 = arith.constant 0 : i32
    %c0_i32_0 = arith.constant 0 : i32
    return %c0_i32, %arg0 : i32, i32
  }
}

</mosaic_0001>

<llo_original>
// kernel: tpu_custom_call.1
$region0: #{tpu_custom_call.1}
  #allocation0 [shape = 'u32[]', space=smem, size = 0x4, offset = 0x4, fixed_abs, tag = 'smem constant byte address 0x4 - core index']
  #allocation1 [shape = 'u32[144,128]{1,0:T(1,128)}', space=vmem, size = 0x12000, scoped, tag = 'internal scratch']
  %s0 = inlined_call_operand.vmem [shape: f32[4,8], index: 0, kind: input, shape index: {}]
  %s1 = inlined_call_operand.vmem [shape: f32[64,4], index: 1, kind: input, shape index: {}]
  %s2 = inlined_call_operand.vmem [shape: f32[64,1], index: 2, kind: input, shape index: {}]
  %s3 = inlined_call_operand.vmem [shape: f32[2,64], index: 3, kind: input, shape index: {}]
  %s4 = inlined_call_operand.vmem [shape: f32[2,1], index: 4, kind: input, shape index: {}]
  %s5 = inlined_call_operand.hbm [shape: f32[2,8], index: 5, kind: output, shape index: {}]
  %s6 = sld [smem:[#allocation0]]
  $region30: #{tpu_custom_call.1} parent=0
    _
  %s8 = ssub.s32 1, %s6
  %s9 = scalar_select 0, %s8, %s6
  $region1: #{tpu_custom_call.1} parent=0
    #allocation2 [shape = 'u8[1024]{0}', space=vmem, size = 0x400, scoped, tag = 'output window, operand 0, single buffered']
    #allocation3 [shape = 's32[1]{0}', space=sflag, size = 0x4, scoped, tag = 'scoped memory for tpu_custom_call.1']
    %10 = vsyncpa [#allocation3], 0
    // Predicated region
    $region2: #{tpu_custom_call.1} parent=1 // pred_check
      _
    $region3: #{tpu_custom_call.1} parent=1 // pred_check_branch
      %12 = sbr.rel (0) target = $region5
    $region4: #{tpu_custom_call.1} parent=1 // pred_region
      _
    $region5: #{tpu_custom_call.1} parent=1 // pred_fallthru
      _
    // Predicated region
    $region6: #{tpu_custom_call.1} parent=1 // pred_check
      _
    $region7: #{tpu_custom_call.1} parent=1 // pred_check_branch
      %14 = sbr.rel (0) target = $region9
    $region8: #{tpu_custom_call.1} parent=1 // pred_region
      _
    $region9: #{tpu_custom_call.1} parent=1 // pred_fallthru
      _
    // Predicated region
    $region10: #{tpu_custom_call.1} parent=1 // pred_check
      _
    $region11: #{tpu_custom_call.1} parent=1 // pred_check_branch
      %16 = sbr.rel (0) target = $region13
    $region12: #{tpu_custom_call.1} parent=1 // pred_region
      _
    $region13: #{tpu_custom_call.1} parent=1 // pred_fallthru
      _
    // Predicated region
    $region14: #{tpu_custom_call.1} parent=1 // pred_check
      _
    $region15: #{tpu_custom_call.1} parent=1 // pred_check_branch
      %18 = sbr.rel (0) target = $region17
    $region16: #{tpu_custom_call.1} parent=1 // pred_region
      _
    $region17: #{tpu_custom_call.1} parent=1 // pred_fallthru
      _
    // Predicated region
    $region18: #{tpu_custom_call.1} parent=1 // pred_check
      _
    $region19: #{tpu_custom_call.1} parent=1 // pred_check_branch
      %20 = sbr.rel (0) target = $region21
    $region20: #{tpu_custom_call.1} parent=1 // pred_region
      _
    $region21: #{tpu_custom_call.1} parent=1 // pred_fallthru
      _
    %v21 = vld [vmem:[%s0] sm:$0xf]
    %v22 = vld [vmem:[%s1] sm:$0xff]
    %v23 = vld [vmem:[%s1 + $0x8] sm:$0xff]
    %v24 = vld [vmem:[%s1 + $0x10] sm:$0xff]
    %v25 = vld [vmem:[%s1 + $0x18] sm:$0xff]
    %v26 = vld [vmem:[%s1 + $0x20] sm:$0xff]
    %v27 = vld [vmem:[%s1 + $0x28] sm:$0xff]
    %v28 = vld [vmem:[%s1 + $0x30] sm:$0xff]
    %v29 = vld [vmem:[%s1 + $0x38] sm:$0xff]
    %v30 = vld [vmem:[%s2] sm:$0xff]
    %v31 = vld [vmem:[%s2 + $0x8] sm:$0xff]
    %v32 = vld [vmem:[%s2 + $0x10] sm:$0xff]
    %v33 = vld [vmem:[%s2 + $0x18] sm:$0xff]
    %v34 = vld [vmem:[%s2 + $0x20] sm:$0xff]
    %v35 = vld [vmem:[%s2 + $0x28] sm:$0xff]
    %v36 = vld [vmem:[%s2 + $0x30] sm:$0xff]
    %v37 = vld [vmem:[%s2 + $0x38] sm:$0xff]
    %39 = vset.pattern.permute.xlu0 0
    %40 = vperm.xlu0 %39, %v30
    %v41 = vpop.permute.xlu0 %40
    %44 = vset.pattern.permute.xlu0 0
    %45 = vperm.xlu0 %44, %v31
    %v46 = vpop.permute.xlu0 %45
    %49 = vset.pattern.permute.xlu0 0
    %50 = vperm.xlu0 %49, %v32
    %v51 = vpop.permute.xlu0 %50
    %54 = vset.pattern.permute.xlu0 0
    %55 = vperm.xlu0 %54, %v33
    %v56 = vpop.permute.xlu0 %55
    %59 = vset.pattern.permute.xlu0 0
    %60 = vperm.xlu0 %59, %v34
    %v61 = vpop.permute.xlu0 %60
    %64 = vset.pattern.permute.xlu0 0
    %65 = vperm.xlu0 %64, %v35
    %v66 = vpop.permute.xlu0 %65
    %69 = vset.pattern.permute.xlu0 0
    %70 = vperm.xlu0 %69, %v36
    %v71 = vpop.permute.xlu0 %70
    %74 = vset.pattern.permute.xlu0 0
    %75 = vperm.xlu0 %74, %v37
    %v76 = vpop.permute.xlu0 %75
    %vm78 = vcmask 31744
    %v80 = vsel %vm78, %v22, 0
    %v83 = vsel %vm78, %v23, 0
    %v86 = vsel %vm78, %v24, 0
    %v89 = vsel %vm78, %v25, 0
    %v92 = vsel %vm78, %v26, 0
    %v95 = vsel %vm78, %v27, 0
    %v98 = vsel %vm78, %v28, 0
    %v101 = vsel %vm78, %v29, 0
    %vm103 = vcmask 1043456
    %v105 = vsel %vm103, %v21, 0
    %107 = vmatprep.subr.mxu0 0.0
    %108 = vmatpush1.msra.mxu0 %v105
    %109 = vmatprep.subr.mxu0 0.0
    %110 = vmatpush1.msra.mxu0 0.0
    %111 = vmatprep.subr.mxu0 0.0
    %112 = vmatpush1.msra.mxu0 0.0
    %113 = vmatprep.subr.mxu0 0.0
    %114 = vmatpush1.msra.mxu0 0.0
    %115 = vmatprep.subr.mxu0 0.0
    %116 = vmatpush1.msra.mxu0 0.0
    %117 = vmatprep.subr.mxu0 0.0
    %118 = vmatpush1.msra.mxu0 0.0
    %119 = vmatprep.subr.mxu0 0.0
    %120 = vmatpush1.msra.mxu0 0.0
    %121 = vmatprep.subr.mxu0 0.0
    %122 = vmatpush1.msra.mxu0 0.0
    %123 = vmatprep.subr.mxu0 0.0
    %124 = vmatpush1.msra.mxu0 0.0
    %125 = vmatprep.subr.mxu0 0.0
    %126 = vmatpush1.msra.mxu0 0.0
    %127 = vmatprep.subr.mxu0 0.0
    %128 = vmatpush1.msra.mxu0 0.0
    %129 = vmatprep.subr.mxu0 0.0
    %130 = vmatpush1.msra.mxu0 0.0
    %131 = vmatprep.subr.mxu0 0.0
    %132 = vmatpush1.msra.mxu0 0.0
    %133 = vmatprep.subr.mxu0 0.0
    %134 = vmatpush1.msra.mxu0 0.0
    %135 = vmatprep.subr.mxu0 0.0
    %136 = vmatpush1.msra.mxu0 0.0
    %137 = vmatprep.subr.mxu0 0.0
    %138 = vmatpush1.msra.mxu0 0.0
    %139 = vmatprep.subr.mxu0 0.0
    %140 = vmatpush1.msra.mxu0 0.0
    %141 = vmatprep.subr.mxu0 0.0
    %142 = vmatpush1.msra.mxu0 0.0
    %143 = vmatprep.subr.mxu0 0.0
    %144 = vmatpush1.msra.mxu0 0.0
    %145 = vmatprep.subr.mxu0 0.0
    %146 = vmatpush1.msra.mxu0 0.0
    %147 = vmatprep.subr.mxu0 0.0
    %148 = vmatpush1.msra.mxu0 0.0
    %149 = vmatprep.subr.mxu0 0.0
    %150 = vmatpush1.msra.mxu0 0.0
    %151 = vmatprep.subr.mxu0 0.0
    %152 = vmatpush1.msra.mxu0 0.0
    %153 = vmatprep.subr.mxu0 0.0
    %154 = vmatpush1.msra.mxu0 0.0
    %155 = vmatprep.subr.mxu0 0.0
    %156 = vmatpush1.msra.mxu0 0.0
    %157 = vmatprep.subr.mxu0 0.0
    %158 = vmatpush1.msra.mxu0 0.0
    %159 = vmatprep.subr.mxu0 0.0
    %160 = vmatpush1.msra.mxu0 0.0
    %161 = vmatprep.subr.mxu0 0.0
    %162 = vmatpush1.msra.mxu0 0.0
    %163 = vmatprep.subr.mxu0 0.0
    %164 = vmatpush1.msra.mxu0 0.0
    %165 = vmatprep.subr.mxu0 0.0
    %166 = vmatpush1.msra.mxu0 0.0
    %167 = vmatprep.subr.mxu0 0.0
    %168 = vmatpush1.msra.mxu0 0.0
    %169 = vmatprep.subr.mxu0 0.0
    %170 = vmatpush1.msra.mxu0 0.0
    %171 = vmatprep.mubr.f32.mxu0 0.0
    %172 = vmatmul.mubr.f32.gmra.mrb[0].mxu0 %v80
    %v173 = vpop.f32.mrb[0].mxu0
    %v174 = vadd.f32 %v41, %v173
    %v175 = vpop.f32.mrb[0].mxu0
    %176 = vmatprep.mubr.f32.mxu0 0.0
    %177 = vmatmul.mubr.f32.gmra.mrb[0].mxu0 %v83
    %v178 = vpop.f32.mrb[0].mxu0
    %v179 = vadd.f32 %v46, %v178
    %v180 = vpop.f32.mrb[0].mxu0
    %181 = vmatprep.mubr.f32.mxu0 0.0
    %182 = vmatmul.mubr.f32.gmra.mrb[0].mxu0 %v86
    %v183 = vpop.f32.mrb[0].mxu0
    %v184 = vadd.f32 %v51, %v183
    %v185 = vpop.f32.mrb[0].mxu0
    %186 = vmatprep.mubr.f32.mxu0 0.0
    %187 = vmatmul.mubr.f32.gmra.mrb[0].mxu0 %v89
    %v188 = vpop.f32.mrb[0].mxu0
    %v189 = vadd.f32 %v56, %v188
    %v190 = vpop.f32.mrb[0].mxu0
    %191 = vmatprep.mubr.f32.mxu0 0.0
    %192 = vmatmul.mubr.f32.gmra.mrb[0].mxu0 %v92
    %v193 = vpop.f32.mrb[0].mxu0
    %v194 = vadd.f32 %v61, %v193
    %v195 = vpop.f32.mrb[0].mxu0
    %196 = vmatprep.mubr.f32.mxu0 0.0
    %197 = vmatmul.mubr.f32.gmra.mrb[0].mxu0 %v95
    %v198 = vpop.f32.mrb[0].mxu0
    %v199 = vadd.f32 %v66, %v198
    %v200 = vpop.f32.mrb[0].mxu0
    %201 = vmatprep.mubr.f32.mxu0 0.0
    %202 = vmatmul.mubr.f32.gmra.mrb[0].mxu0 %v98
    %v203 = vpop.f32.mrb[0].mxu0
    %v204 = vadd.f32 %v71, %v203
    %v205 = vpop.f32.mrb[0].mxu0
    %206 = vmatprep.mubr.f32.mxu0 0.0
    %207 = vmatmul.mubr.f32.gmra.mrb[0].mxu0 %v101
    %v208 = vpop.f32.mrb[0].mxu0
    %v209 = vadd.f32 %v76, %v208
    %v210 = vpop.f32.mrb[0].mxu0
    %211 = vdwg.mxu0
    %v212 = vtanh.pop %v174
    %v213 = vtanh.pop %v179
    %v214 = vtanh.pop %v184
    %v215 = vtanh.pop %v189
    %v216 = vtanh.pop %v194
    %v217 = vtanh.pop %v199
    %v218 = vtanh.pop %v204
    %v219 = vtanh.pop %v209
    %v220 = vld [vmem:[%s3] sm:$0x3]
    %v221 = vld [vmem:[%s4] sm:$0x3]
    %223 = vset.pattern.permute.xlu0 0
    %224 = vperm.xlu0 %223, %v221
    %v225 = vpop.permute.xlu0 %224
    %vm227 = vcmask 523264
    %v229 = vsel %vm227, %v220, 0
    %231 = vmatprep.subr.mxu0 0.0
    %232 = vmatpush1.msra.mxu0 %v212
    %233 = vmatprep.subr.mxu0 0.0
    %234 = vmatpush1.msra.mxu0 %v213
    %235 = vmatprep.subr.mxu0 0.0
    %236 = vmatpush1.msra.mxu0 %v214
    %237 = vmatprep.subr.mxu0 0.0
    %238 = vmatpush1.msra.mxu0 %v215
    %239 = vmatprep.subr.mxu0 0.0
    %240 = vmatpush1.msra.mxu0 %v216
    %241 = vmatprep.subr.mxu0 0.0
    %242 = vmatpush1.msra.mxu0 %v217
    %243 = vmatprep.subr.mxu0 0.0
    %244 = vmatpush1.msra.mxu0 %v218
    %245 = vmatprep.subr.mxu0 0.0
    %246 = vmatpush1.msra.mxu0 %v219
    %247 = vmatprep.subr.mxu0 0.0
    %248 = vmatpush1.msra.mxu0 0.0
    %249 = vmatprep.subr.mxu0 0.0
    %250 = vmatpush1.msra.mxu0 0.0
    %251 = vmatprep.subr.mxu0 0.0
    %252 = vmatpush1.msra.mxu0 0.0
    %253 = vmatprep.subr.mxu0 0.0
    %254 = vmatpush1.msra.mxu0 0.0
    %255 = vmatprep.subr.mxu0 0.0
    %256 = vmatpush1.msra.mxu0 0.0
    %257 = vmatprep.subr.mxu0 0.0
    %258 = vmatpush1.msra.mxu0 0.0
    %259 = vmatprep.subr.mxu0 0.0
    %260 = vmatpush1.msra.mxu0 0.0
    %261 = vmatprep.subr.mxu0 0.0
    %262 = vmatpush1.msra.mxu0 0.0
    %263 = vmatprep.subr.mxu0 0.0
    %264 = vmatpush1.msra.mxu0 0.0
    %265 = vmatprep.subr.mxu0 0.0
    %266 = vmatpush1.msra.mxu0 0.0
    %267 = vmatprep.subr.mxu0 0.0
    %268 = vmatpush1.msra.mxu0 0.0
    %269 = vmatprep.subr.mxu0 0.0
    %270 = vmatpush1.msra.mxu0 0.0
    %271 = vmatprep.subr.mxu0 0.0
    %272 = vmatpush1.msra.mxu0 0.0
    %273 = vmatprep.subr.mxu0 0.0
    %274 = vmatpush1.msra.mxu0 0.0
    %275 = vmatprep.subr.mxu0 0.0
    %276 = vmatpush1.msra.mxu0 0.0
    %277 = vmatprep.subr.mxu0 0.0
    %278 = vmatpush1.msra.mxu0 0.0
    %279 = vmatprep.subr.mxu0 0.0
    %280 = vmatpush1.msra.mxu0 0.0
    %281 = vmatprep.subr.mxu0 0.0
    %282 = vmatpush1.msra.mxu0 0.0
    %283 = vmatprep.subr.mxu0 0.0
    %284 = vmatpush1.msra.mxu0 0.0
    %285 = vmatprep.subr.mxu0 0.0
    %286 = vmatpush1.msra.mxu0 0.0
    %287 = vmatprep.subr.mxu0 0.0
    %288 = vmatpush1.msra.mxu0 0.0
    %289 = vmatprep.subr.mxu0 0.0
    %290 = vmatpush1.msra.mxu0 0.0
    %291 = vmatprep.subr.mxu0 0.0
    %292 = vmatpush1.msra.mxu0 0.0
    %293 = vmatprep.subr.mxu0 0.0
    %294 = vmatpush1.msra.mxu0 0.0
    %295 = vmatprep.mubr.f32.mxu0 0.0
    %296 = vmatmul.mubr.f32.gmra.mrb[0].mxu0 %v229
    %v297 = vpop.f32.mrb[0].mxu0
    %v298 = vadd.f32 %v225, %v297
    %v299 = vpop.f32.mrb[0].mxu0
    %300 = vdwg.mxu0
    %vm301 = vcmask 58368
    %302 = vst.msk [vmem:[#allocation2] sm:$0x3] %vm301, %v298
    // Predicated region
    $region22: #{tpu_custom_call.1} parent=1 // pred_check
      _
    $region23: #{tpu_custom_call.1} parent=1 // pred_check_branch
      %304 = sbr.rel (0) target = $region25
    $region24: #{tpu_custom_call.1} parent=1 // pred_region
      %s306 = ssub.s32 32, 32
      %307 = vsyncadd [#allocation3], %s306
      %s309 = sshll.u32 [#allocation2], 4
      %s310 = int_to_ptr.vmem [resolvable:$true] %s309
      %312 = dma.vmem_to_hbm [thread:$0]  %s310, 32, %s5, [#allocation3]
    $region25: #{tpu_custom_call.1} parent=1 // pred_fallthru
      _
    // Predicated region
    $region26: #{tpu_custom_call.1} parent=1 // pred_check
      _
    $region27: #{tpu_custom_call.1} parent=1 // pred_check_branch
      %314 = sbr.rel (0) target = $region29
    $region28: #{tpu_custom_call.1} parent=1 // pred_region
      %315 = dma.done [#allocation3], 32
    $region29: #{tpu_custom_call.1} parent=1 // pred_fallthru
      _
    %316 = vsyncpa [#allocation3], 1

</llo_original>
